<compile_context>
chip_gen: v7x
topology: tpu7x:2x2x1
jax: 0.10.0
libtpu: 0.0.40
codegen_flags: <defaults>
</compile_context>

<pallas_src>
import math
from functools import partial

import jax
import jax.numpy as jnp
from jax.experimental import pallas as pl
from jax.experimental.pallas import tpu as pltpu


def _rup(x, m):
    return ((x + m - 1) // m) * m


def _detect_lane_align():
    # v6e / v7x have a 2x256x256 MXU -> prefer 256-aligned N; v5e (4x128x128)
    # is saturated at 128 and padding further just wastes FLOPs/bytes.
    try:
        kind = jax.devices()[0].device_kind.lower()
    except Exception:
        return 128
    if ("v6" in kind) or ("v7" in kind) or ("7x" in kind):
        return 256
    return 128


LANE = _detect_lane_align()


def _mtiles(M, target=512):
    """Split M rows into n_m tiles of tm (mult of 8).  Guarantees >=2 tiles
    when M is big enough so the second TensorCore (v7x) is not idle."""
    n = max(-(-M // target), 1)
    if n == 1 and M >= 256:
        n = 2
    tm = _rup(-(-M // n), 8)
    return tm, n, tm * n


# ---------------- Pallas kernels ----------------

def _mm_kernel(a_ref, b_ref, s_ref, t_ref, o_ref, *, relu):
    """One (tm, Np) output tile; whole K and whole N in a single shot."""
    acc = jnp.dot(a_ref[...], b_ref[...], preferred_element_type=jnp.float32)
    y = acc * s_ref[...] + t_ref[...]
    if relu:
        y = jnp.maximum(y, 0.0)
    o_ref[...] = y.astype(o_ref.dtype)


@partial(jax.jit, static_argnames=("relu", "out_dtype"))
def fused_matmul(a, b, s, t, relu=True, out_dtype=jnp.bfloat16):
    """relu((a @ b) * scale + shift).
    a: (M, K) any float; b: (K, Np) bf16 (Np lane aligned); s/t: (1, Np) f32.
    Returns (M, Np) in out_dtype.  B stays resident in VMEM (single K/N tile),
    so the activation strip is streamed from HBM exactly once."""
    M, K = a.shape
    _, Np = b.shape
    tm, n_m, Mp = _mtiles(M)
    a_p = jnp.pad(a.astype(jnp.bfloat16), ((0, Mp - M), (0, 0)))

    out = pl.pallas_call(
        partial(_mm_kernel, relu=relu),
        out_shape=jax.ShapeDtypeStruct((Mp, Np), out_dtype),
        grid=(n_m,),
        in_specs=[
            pl.BlockSpec((tm, K), lambda i: (i, 0)),
            pl.BlockSpec((K, Np), lambda i: (0, 0)),
            pl.BlockSpec((1, Np), lambda i: (0, 0)),
            pl.BlockSpec((1, Np), lambda i: (0, 0)),
        ],
        out_specs=pl.BlockSpec((tm, Np), lambda i: (i, 0)),
        compiler_params=pltpu.CompilerParams(
            dimension_semantics=("parallel",)),
        cost_estimate=pl.CostEstimate(
            flops=2 * Mp * K * Np, transcendentals=0,
            bytes_accessed=Mp * K * 2 + K * Np * 2 + Mp * Np * 2),
    )(a_p, b, s, t)
    return out[:M]


def _tap_conv_kernel(x_ref, w_ref, s_ref, t_ref, o_ref, *, offs, relu):
    """Stride-1 kxk conv: accumulate the kh*kw taps as shifted slices of the
    flat padded image that is resident in VMEM (no HBM im2col)."""
    tm, cout = o_ref.shape
    m0 = pl.program_id(1) * tm
    acc = jnp.zeros((tm, cout), jnp.float32)
    for i, off in enumerate(offs):
        a = x_ref[pl.ds(m0 + off, tm), :]
        acc = acc + jnp.dot(a, w_ref[i], preferred_element_type=jnp.float32)
    y = acc * s_ref[...] + t_ref[...]
    if relu:
        y = jnp.maximum(y, 0.0)
    o_ref[...] = y.astype(o_ref.dtype)


@partial(jax.jit, static_argnames=("kh", "kw", "ph", "pw"))
def tap_conv(x, w, s, t, *, kh, kw, ph, pw):
    """BasicConv2d (stride 1, kernel > 1): conv + BN + ReLU, taps folded into
    the K reduction.  Rows are computed over the padded width (kw-1 junk
    columns per row) so every tap is a contiguous shift of one flat view."""
    N, H, W, Cin = x.shape
    cout = w.shape[-1]
    x = x.astype(jnp.bfloat16)
    Hp, Wp = H + 2 * ph, W + 2 * pw
    Ho, Wo = Hp - kh + 1, Wp - kw + 1
    xp = jnp.pad(x, ((0, 0), (ph, ph), (pw, pw), (0, 0)))
    xf = xp.reshape(N, Hp * Wp, Cin)

    M = Ho * Wp
    tm, n_m, Mp = _mtiles(M)
    offs = tuple(dy * Wp + dx for dy in range(kh) for dx in range(kw))
    L = max(Mp + offs[-1], Hp * Wp)
    if L > Hp * Wp:
        xf = jnp.pad(xf, ((0, 0), (0, L - Hp * Wp), (0, 0)))

    out = pl.pallas_call(
        partial(_tap_conv_kernel, offs=offs, relu=True),
        out_shape=jax.ShapeDtypeStruct((N, Mp, cout), jnp.bfloat16),
        grid=(N, n_m),
        in_specs=[
            pl.BlockSpec((None, L, Cin), lambda n, m: (n, 0, 0)),
            pl.BlockSpec((kh * kw, Cin, cout), lambda n, m: (0, 0, 0)),
            pl.BlockSpec((1, cout), lambda n, m: (0, 0)),
            pl.BlockSpec((1, cout), lambda n, m: (0, 0)),
        ],
        out_specs=pl.BlockSpec((None, tm, cout), lambda n, m: (n, m, 0)),
        compiler_params=pltpu.CompilerParams(
            dimension_semantics=("parallel", "parallel")),
        cost_estimate=pl.CostEstimate(
            flops=2 * N * Mp * Cin * cout * len(offs), transcendentals=0,
            bytes_accessed=N * (L * Cin * 2 + Mp * cout * 2)
            + kh * kw * Cin * cout * 2),
    )(xf, w, s, t)
    y = out[:, :Ho * Wp, :].reshape(N, Ho, Wp, cout)[:, :, :Wo, :]
    return y


def _avgpool_kernel(x_ref, o_ref, *, offs, inv):
    tm = o_ref.shape[0]
    m0 = pl.program_id(1) * tm
    acc = jnp.zeros(o_ref.shape, jnp.float32)
    for off in offs:
        acc = acc + x_ref[pl.ds(m0 + off, tm), :].astype(jnp.float32)
    o_ref[...] = (acc * inv).astype(o_ref.dtype)


@partial(jax.jit, static_argnames=("k", "pad"))
def avg_pool_same(x, k=3, pad=1):
    """kxk stride-1 average pool (count_include_pad=True) via flat taps:
    single read of the padded map, f32 accumulation, bf16 output."""
    N, H, W, C = x.shape
    x = x.astype(jnp.bfloat16)
    Hp, Wp = H + 2 * pad, W + 2 * pad
    Ho, Wo = Hp - k + 1, Wp - k + 1
    xf = jnp.pad(x, ((0, 0), (pad, pad), (pad, pad), (0, 0))).reshape(N, Hp * Wp, C)

    M = Ho * Wp
    tm, n_m, Mp = _mtiles(M)
    offs = tuple(dy * Wp + dx for dy in range(k) for dx in range(k))
    L = max(Mp + offs[-1], Hp * Wp)
    if L > Hp * Wp:
        xf = jnp.pad(xf, ((0, 0), (0, L - Hp * Wp), (0, 0)))

    out = pl.pallas_call(
        partial(_avgpool_kernel, offs=offs, inv=1.0 / (k * k)),
        out_shape=jax.ShapeDtypeStruct((N, Mp, C), jnp.bfloat16),
        grid=(N, n_m),
        in_specs=[pl.BlockSpec((None, L, C), lambda n, m: (n, 0, 0))],
        out_specs=pl.BlockSpec((None, tm, C), lambda n, m: (n, m, 0)),
        compiler_params=pltpu.CompilerParams(
            dimension_semantics=("parallel", "parallel")),
    )(xf)
    return out[:, :Ho * Wp, :].reshape(N, Ho, Wp, C)[:, :, :Wo, :]


def _maxpool_kernel(p_ref, o_ref):
    kk = pl.program_id(1)

    @pl.when(kk == 0)
    def _():
        o_ref[...] = jnp.full(o_ref.shape, -jnp.inf, o_ref.dtype)

    o_ref[...] = jnp.maximum(o_ref[...], p_ref[...])


@partial(jax.jit, static_argnames=("k", "s"))
def max_pool(x, k, s):
    # TODO(synk): replace the bf16 patch stack with a halo-block / strided-load
    # max-pool kernel; only 4 layers use this so it is not the dominant cost.
    N, H, W, C = x.shape
    x = x.astype(jnp.bfloat16)
    Ho = (H - k) // s + 1
    Wo = (W - k) // s + 1
    views = [x[:, i:i + s * Ho:s, j:j + s * Wo:s, :].reshape(N * Ho * Wo, C)
             for i in range(k) for j in range(k)]
    patches = jnp.stack(views, axis=0)            # (KK, M, C) bf16
    KK, M, C = patches.shape
    tm, n_m, Mp = _mtiles(M)
    Cp = _rup(C, 128)
    pp = jnp.pad(patches, ((0, 0), (0, Mp - M), (0, Cp - C)))

    out = pl.pallas_call(
        _maxpool_kernel,
        out_shape=jax.ShapeDtypeStruct((Mp, Cp), jnp.bfloat16),
        grid=(n_m, KK),
        in_specs=[pl.BlockSpec((None, tm, Cp), lambda i, kk: (kk, i, 0))],
        out_specs=pl.BlockSpec((tm, Cp), lambda i, kk: (i, 0)),
        compiler_params=pltpu.CompilerParams(
            dimension_semantics=("parallel", "arbitrary")),
    )(pp)
    return out[:M, :C].reshape(N, Ho, Wo, C)


def _gap_kernel(x_ref, o_ref, *, inv):
    o_ref[...] = jnp.sum(x_ref[...].astype(jnp.float32), axis=1) * inv


@jax.jit
def global_avg_pool(x):
    N, H, W, C = x.shape
    xf = x.reshape(N, H * W, C)
    return pl.pallas_call(
        partial(_gap_kernel, inv=1.0 / (H * W)),
        out_shape=jax.ShapeDtypeStruct((N, C), jnp.float32),
        grid=(1,),
        in_specs=[pl.BlockSpec((N, H * W, C), lambda i: (0, 0, 0))],
        out_specs=pl.BlockSpec((N, C), lambda i: (0, 0)),
    )(xf)


# ---------------- JAX glue: conv dispatch / pooling / linear ----------------

def _shifted_views(x, kh, kw, sh, sw, ph, pw):
    N, H, W, C = x.shape
    xp = x
    if ph or pw:
        xp = jnp.pad(x, ((0, 0), (ph, ph), (pw, pw), (0, 0)))
    Ho = (H + 2 * ph - kh) // sh + 1
    Wo = (W + 2 * pw - kw) // sw + 1
    views = [xp[:, i:i + sh * Ho:sh, j:j + sw * Wo:sw, :]
             for i in range(kh) for j in range(kw)]
    return views, Ho, Wo


def conv_bn_relu(x, cp):
    """BasicConv2d: Conv(bias=False) -> BatchNorm(eval, eps=1e-3) -> ReLU."""
    if cp["kind"] == "tap":
        return tap_conv(x, cp["W"], cp["scale"], cp["shift"],
                        kh=cp["kh"], kw=cp["kw"],
                        ph=cp["pad"][0], pw=cp["pad"][1])
    N, H, W, Cin = x.shape
    kh, kw = cp["kh"], cp["kw"]
    sh, sw = cp["stride"]
    ph, pw = cp["pad"]
    if (kh, kw) == (1, 1):
        A = x.reshape(N * H * W, Cin)
        Ho, Wo = H, W
    else:
        # TODO(synk): stride-2 convs (5 layers) still use bf16 im2col; a
        # strided flat-tap kernel would remove this last patch materialization.
        views, Ho, Wo = _shifted_views(x.astype(jnp.bfloat16),
                                       kh, kw, sh, sw, ph, pw)
        A = jnp.stack(views, axis=3).reshape(N * Ho * Wo, kh * kw * Cin)
    y = fused_matmul(A, cp["B"], cp["scale"], cp["shift"], relu=True)
    return y[:, :cp["cout"]].reshape(N, Ho, Wo, cp["cout"])


def conv1x1_group(x, gp):
    """Several 1x1 BasicConv2d sharing the same input, fused into one matmul."""
    N, H, W, Cin = x.shape
    A = x.reshape(N * H * W, Cin)
    y = fused_matmul(A, gp["B"], gp["scale"], gp["shift"], relu=True)
    outs, off = [], 0
    for c in gp["couts"]:
        outs.append(y[:, off:off + c].reshape(N, H, W, c))
        off += c
    return outs


def linear(x, fcp):
    y = fused_matmul(x, fcp["B"], fcp["scale"], fcp["shift"],
                     relu=False, out_dtype=jnp.float32)
    return y[:, :fcp["nout"]]


# ---------------- deterministic parameter construction ----------------

class Gen:
    def __init__(self, seed=0):
        self._key = jax.random.PRNGKey(seed)
        self._n = 0

    def next(self):
        self._n += 1
        return jax.random.fold_in(self._key, self._n)


def conv_raw(g, cin, cout, kernel, stride=1, padding=0):
    kh, kw = (kernel, kernel) if isinstance(kernel, int) else kernel
    stride = (stride, stride) if isinstance(stride, int) else stride
    padding = (padding, padding) if isinstance(padding, int) else padding
    k1, k2, k3, k4, k5 = jax.random.split(g.next(), 5)
    fan = cin * kh * kw
    return {
        "w": jax.random.normal(k1, (cout, cin, kh, kw), jnp.float32) * math.sqrt(2.0 / fan),
        "gamma": 1.0 + 0.05 * jax.random.normal(k2, (cout,), jnp.float32),
        "beta": 0.05 * jax.random.normal(k3, (cout,), jnp.float32),
        "mean": 0.05 * jax.random.normal(k4, (cout,), jnp.float32),
        "var": 1.0 + 0.05 * jnp.abs(jax.random.normal(k5, (cout,), jnp.float32)),
        "stride": stride,
        "pad": padding,
    }


def _fold_bn(p):
    scale = p["gamma"] / jnp.sqrt(p["var"] + 1e-3)
    shift = p["beta"] - p["mean"] * scale
    return scale, shift


def prep_conv(p):
    """Fold BN once; stride-1 k>1 convs -> tap format (KK, Cin, Cout) bf16,
    everything else -> (K, Np) bf16 matmul weights (N lane aligned)."""
    w = p["w"]
    cout, cin, kh, kw = w.shape
    sh, sw = p["stride"]
    scale, shift = _fold_bn(p)
    if (kh, kw) != (1, 1) and (sh, sw) == (1, 1):
        W = jnp.transpose(w, (2, 3, 1, 0)).reshape(kh * kw, cin, cout)
        return {
            "kind": "tap",
            "W": W.astype(jnp.bfloat16),
            "scale": scale.reshape(1, cout).astype(jnp.float32),
            "shift": shift.reshape(1, cout).astype(jnp.float32),
            "cout": cout, "kh": kh, "kw": kw, "pad": p["pad"],
        }
    K = kh * kw * cin
    B = jnp.transpose(w, (2, 3, 1, 0)).reshape(K, cout)
    Np = _rup(cout, LANE)
    return {
        "kind": "mm",
        "B": jnp.zeros((K, Np), jnp.bfloat16).at[:, :cout].set(B.astype(jnp.bfloat16)),
        "scale": jnp.zeros((1, Np), jnp.float32).at[0, :cout].set(scale),
        "shift": jnp.zeros((1, Np), jnp.float32).at[0, :cout].set(shift),
        "cout": cout, "kh": kh, "kw": kw,
        "stride": p["stride"], "pad": p["pad"],
    }


def prep_conv_group(plist):
    """Concatenate several 1x1 convs (same Cin) along N for one wide matmul."""
    Bs, ss, ts, couts = [], [], [], []
    for p in plist:
        w = p["w"]
        cout, cin, kh, kw = w.shape
        assert kh == 1 and kw == 1
        Bs.append(jnp.transpose(w.reshape(cout, cin)))
        s, t = _fold_bn(p)
        ss.append(s)
        ts.append(t)
        couts.append(cout)
    B = jnp.concatenate(Bs, axis=1)
    scale = jnp.concatenate(ss)
    shift = jnp.concatenate(ts)
    K, Nt = B.shape
    Np = _rup(Nt, LANE)
    return {
        "B": jnp.zeros((K, Np), jnp.bfloat16).at[:, :Nt].set(B.astype(jnp.bfloat16)),
        "scale": jnp.zeros((1, Np), jnp.float32).at[0, :Nt].set(scale),
        "shift": jnp.zeros((1, Np), jnp.float32).at[0, :Nt].set(shift),
        "couts": tuple(couts),
    }


def make_inception_a(g, cin, pool_features):
    raw = {
        "b1": conv_raw(g, cin, 64, 1),
        "b5_1": conv_raw(g, cin, 48, 1),
        "b5_2": conv_raw(g, 48, 64, 5, padding=2),
        "b3d_1": conv_raw(g, cin, 64, 1),
        "b3d_2": conv_raw(g, 64, 96, 3, padding=1),
        "b3d_3": conv_raw(g, 96, 96, 3, padding=1),
        "bp": conv_raw(g, cin, pool_features, 1),
    }
    return {
        "head": prep_conv_group([raw["b1"], raw["b5_1"], raw["b3d_1"]]),
        "b5_2": prep_conv(raw["b5_2"]),
        "b3d_2": prep_conv(raw["b3d_2"]),
        "b3d_3": prep_conv(raw["b3d_3"]),
        "bp": prep_conv(raw["bp"]),
    }


def make_inception_b(g, cin):
    raw = {
        "b3": conv_raw(g, cin, 384, 3, stride=2),
        "b3d_1": conv_raw(g, cin, 64, 1),
        "b3d_2": conv_raw(g, 64, 96, 3, padding=1),
        "b3d_3": conv_raw(g, 96, 96, 3, stride=2),
    }
    return {k: prep_conv(v) for k, v in raw.items()}


def make_inception_c(g, cin, c7):
    raw = {
        "b1": conv_raw(g, cin, 192, 1),
        "b7_1": conv_raw(g, cin, c7, 1),
        "b7_2": conv_raw(g, c7, c7, (1, 7), padding=(0, 3)),
        "b7_3": conv_raw(g, c7, 192, (7, 1), padding=(3, 0)),
        "b7d_1": conv_raw(g, cin, c7, 1),
        "b7d_2": conv_raw(g, c7, c7, (7, 1), padding=(3, 0)),
        "b7d_3": conv_raw(g, c7, c7, (1, 7), padding=(0, 3)),
        "b7d_4": conv_raw(g, c7, c7, (7, 1), padding=(3, 0)),
        "b7d_5": conv_raw(g, c7, 192, (1, 7), padding=(0, 3)),
        "bp": conv_raw(g, cin, 192, 1),
    }
    out = {"head": prep_conv_group([raw["b1"], raw["b7_1"], raw["b7d_1"]])}
    for k in ("b7_2", "b7_3", "b7d_2", "b7d_3", "b7d_4", "b7d_5", "bp"):
        out[k] = prep_conv(raw[k])
    return out


def make_inception_d(g, cin):
    raw = {
        "b3_1": conv_raw(g, cin, 192, 1),
        "b3_2": conv_raw(g, 192, 320, 3, stride=2),
        "b7_1": conv_raw(g, cin, 192, 1),
        "b7_2": conv_raw(g, 192, 192, (1, 7), padding=(0, 3)),
        "b7_3": conv_raw(g, 192, 192, (7, 1), padding=(3, 0)),
        "b7_4": conv_raw(g, 192, 192, 3, stride=2),
    }
    out = {"head": prep_conv_group([raw["b3_1"], raw["b7_1"]])}
    for k in ("b3_2", "b7_2", "b7_3", "b7_4"):
        out[k] = prep_conv(raw[k])
    return out


def make_inception_e(g, cin):
    raw = {
        "b1": conv_raw(g, cin, 320, 1),
        "b3_1": conv_raw(g, cin, 384, 1),
        "b3_2a": conv_raw(g, 384, 384, (1, 3), padding=(0, 1)),
        "b3_2b": conv_raw(g, 384, 384, (3, 1), padding=(1, 0)),
        "b3d_1": conv_raw(g, cin, 448, 1),
        "b3d_2": conv_raw(g, 448, 384, 3, padding=1),
        "b3d_3a": conv_raw(g, 384, 384, (1, 3), padding=(0, 1)),
        "b3d_3b": conv_raw(g, 384, 384, (3, 1), padding=(1, 0)),
        "bp": conv_raw(g, cin, 192, 1),
    }
    out = {"head": prep_conv_group([raw["b1"], raw["b3_1"], raw["b3d_1"]])}
    for k in ("b3_2a", "b3_2b", "b3d_2", "b3d_3a", "b3d_3b", "bp"):
        out[k] = prep_conv(raw[k])
    return out


def make_params(num_classes, seed=0):
    g = Gen(seed)
    p = {}
    p["c1a"] = prep_conv(conv_raw(g, 3, 32, 3, stride=2))
    p["c2a"] = prep_conv(conv_raw(g, 32, 32, 3))
    p["c2b"] = prep_conv(conv_raw(g, 32, 64, 3, padding=1))
    p["c3b"] = prep_conv(conv_raw(g, 64, 80, 1))
    p["c4a"] = prep_conv(conv_raw(g, 80, 192, 3))
    p["m5b"] = make_inception_a(g, 192, 32)
    p["m5c"] = make_inception_a(g, 256, 64)
    p["m5d"] = make_inception_a(g, 288, 64)
    p["m6a"] = make_inception_b(g, 288)
    p["m6b"] = make_inception_c(g, 768, 128)
    p["m6c"] = make_inception_c(g, 768, 160)
    p["m6d"] = make_inception_c(g, 768, 160)
    p["m6e"] = make_inception_c(g, 768, 192)
    p["m7a"] = make_inception_d(g, 768)
    p["m7b"] = make_inception_e(g, 1280)
    p["m7c"] = make_inception_e(g, 2048)
    k1, k2 = jax.random.split(g.next())
    w = jax.random.normal(k1, (num_classes, 2048), jnp.float32) * 0.02
    b = jax.random.normal(k2, (num_classes,), jnp.float32) * 0.02
    K, Nt = 2048, num_classes
    Np = _rup(Nt, LANE)
    p["fc"] = {
        "B": jnp.zeros((K, Np), jnp.bfloat16).at[:, :Nt].set(
            jnp.transpose(w).astype(jnp.bfloat16)),
        "scale": jnp.zeros((1, Np), jnp.float32).at[0, :Nt].set(
            jnp.ones((Nt,), jnp.float32)),
        "shift": jnp.zeros((1, Np), jnp.float32).at[0, :Nt].set(b),
        "nout": Nt,
    }
    return p


# ---------------- block forwards ----------------

def inception_a_fwd(x, p):
    b1, b5, b3d = conv1x1_group(x, p["head"])
    b5 = conv_bn_relu(b5, p["b5_2"])
    b3d = conv_bn_relu(conv_bn_relu(b3d, p["b3d_2"]), p["b3d_3"])
    bp = conv_bn_relu(avg_pool_same(x), p["bp"])
    return jnp.concatenate([b1, b5, b3d, bp], axis=-1)


def inception_b_fwd(x, p):
    b3 = conv_bn_relu(x, p["b3"])
    b3d = conv_bn_relu(conv_bn_relu(conv_bn_relu(x, p["b3d_1"]), p["b3d_2"]), p["b3d_3"])
    bp = max_pool(x, k=3, s=2)
    return jnp.concatenate([b3, b3d, bp], axis=-1)


def inception_c_fwd(x, p):
    b1, b7, b7d = conv1x1_group(x, p["head"])
    b7 = conv_bn_relu(conv_bn_relu(b7, p["b7_2"]), p["b7_3"])
    b7d = conv_bn_relu(b7d, p["b7d_2"])
    b7d = conv_bn_relu(b7d, p["b7d_3"])
    b7d = conv_bn_relu(b7d, p["b7d_4"])
    b7d = conv_bn_relu(b7d, p["b7d_5"])
    bp = conv_bn_relu(avg_pool_same(x), p["bp"])
    return jnp.concatenate([b1, b7, b7d, bp], axis=-1)


def inception_d_fwd(x, p):
    b3, b7 = conv1x1_group(x, p["head"])
    b3 = conv_bn_relu(b3, p["b3_2"])
    b7 = conv_bn_relu(b7, p["b7_2"])
    b7 = conv_bn_relu(b7, p["b7_3"])
    b7 = conv_bn_relu(b7, p["b7_4"])
    bp = max_pool(x, k=3, s=2)
    return jnp.concatenate([b3, b7, bp], axis=-1)


def inception_e_fwd(x, p):
    b1, b3, b3d = conv1x1_group(x, p["head"])
    b3 = jnp.concatenate([conv_bn_relu(b3, p["b3_2a"]),
                          conv_bn_relu(b3, p["b3_2b"])], axis=-1)
    b3d = conv_bn_relu(b3d, p["b3d_2"])
    b3d = jnp.concatenate([conv_bn_relu(b3d, p["b3d_3a"]),
                           conv_bn_relu(b3d, p["b3d_3b"])], axis=-1)
    bp = conv_bn_relu(avg_pool_same(x), p["bp"])
    return jnp.concatenate([b1, b3, b3d, bp], axis=-1)


def inception_v3_forward(x_nchw, params):
    # input transform (same constants as the PyTorch module)
    x0 = x_nchw[:, 0:1] * (0.229 / 0.5) + (0.485 - 0.5) / 0.5
    x1 = x_nchw[:, 1:2] * (0.224 / 0.5) + (0.456 - 0.5) / 0.5
    x2 = x_nchw[:, 2:3] * (0.225 / 0.5) + (0.406 - 0.5) / 0.5
    x = jnp.concatenate([x0, x1, x2], axis=1)
    x = jnp.transpose(x, (0, 2, 3, 1))      # NCHW -> NHWC for the kernels

    x = conv_bn_relu(x, params["c1a"])
    x = conv_bn_relu(x, params["c2a"])
    x = conv_bn_relu(x, params["c2b"])
    x = max_pool(x, k=3, s=2)
    x = conv_bn_relu(x, params["c3b"])
    x = conv_bn_relu(x, params["c4a"])
    x = max_pool(x, k=3, s=2)
    x = inception_a_fwd(x, params["m5b"])
    x = inception_a_fwd(x, params["m5c"])
    x = inception_a_fwd(x, params["m5d"])
    x = inception_b_fwd(x, params["m6a"])
    x = inception_c_fwd(x, params["m6b"])
    x = inception_c_fwd(x, params["m6c"])
    x = inception_c_fwd(x, params["m6d"])
    x = inception_c_fwd(x, params["m6e"])
    # TODO(synk): AuxLogits branch and Dropout are training-mode only; this is
    # the eval-mode forward (aux skipped, dropout = identity).
    x = inception_d_fwd(x, params["m7a"])
    x = inception_e_fwd(x, params["m7b"])
    x = inception_e_fwd(x, params["m7c"])
    x = global_avg_pool(x)                   # (N, 2048) f32
    logits = linear(x, params["fc"])
    return logits


if __name__ == "__main__":
    num_classes = 10
    # smallest spatial size that keeps every stride-2 stage valid is 75x75
    x = jax.random.normal(jax.random.PRNGKey(0), (2, 3, 75, 75), jnp.float32)
    params = make_params(num_classes, seed=0)
    out = inception_v3_forward(x, params)
    out = jax.block_until_ready(out)
    assert out.shape == (2, num_classes), out.shape
    assert bool(jnp.all(jnp.isfinite(out)))
    print("KERNEL_OK")
</pallas_src>

<mosaic_0001>
module attributes {stable_mosaic.version = 11 : i64} {
  func.func @_mm_kernel(%arg0: i32, %arg1: memref<464x27xbf16, #tpu.memory_space<vmem>>, %arg2: memref<27x128xbf16, #tpu.memory_space<vmem>>, %arg3: memref<1x128xf32, #tpu.memory_space<vmem>>, %arg4: memref<1x128xf32, #tpu.memory_space<vmem>>, %arg5: memref<464x128xbf16, #tpu.memory_space<vmem>>) attributes {dimension_semantics = [#tpu.dimension_semantics<parallel>], iteration_bounds = array<i64: 6>, scalar_prefetch = 0 : i64, scratch_operands = 0 : i64, tpu.core_type = #tpu.core_type<tc>, window_params = [{transform_indices = @transform_0, window_bounds = array<i64: 464, 27>}, {pipeline_mode = #tpu.pipeline_mode<synchronous>, transform_indices = @transform_1, window_bounds = array<i64: 27, 128>}, {pipeline_mode = #tpu.pipeline_mode<synchronous>, transform_indices = @transform_2, window_bounds = array<i64: 1, 128>}, {pipeline_mode = #tpu.pipeline_mode<synchronous>, transform_indices = @transform_3, window_bounds = array<i64: 1, 128>}, {transform_indices = @transform_4, window_bounds = array<i64: 464, 128>}]} {
    %c0 = arith.constant 0 : index
    %c0_0 = arith.constant 0 : index
    %0 = vector.load %arg1[%c0, %c0_0] : memref<464x27xbf16, #tpu.memory_space<vmem>>, vector<464x27xbf16>
    %c0_1 = arith.constant 0 : index
    %c0_2 = arith.constant 0 : index
    %1 = vector.load %arg2[%c0_1, %c0_2] : memref<27x128xbf16, #tpu.memory_space<vmem>>, vector<27x128xbf16>
    %cst = arith.constant dense<0.000000e+00> : vector<464x128xf32>
    %2 = tpu.matmul %0, %1, %cst {dimension_numbers = #tpu.dot_dimension_numbers<[1], [0], [0], [1], [0, 0, 1, 1], [], []>} : vector<464x27xbf16>, vector<27x128xbf16>, vector<464x128xf32> -> vector<464x128xf32>
    %c0_3 = arith.constant 0 : index
    %c0_4 = arith.constant 0 : index
    %3 = vector.load %arg3[%c0_3, %c0_4] : memref<1x128xf32, #tpu.memory_space<vmem>>, vector<1x128xf32>
    %4 = vector.broadcast %3 : vector<1x128xf32> to vector<464x128xf32>
    %5 = arith.mulf %2, %4 : vector<464x128xf32>
    %c0_5 = arith.constant 0 : index
    %c0_6 = arith.constant 0 : index
    %6 = vector.load %arg4[%c0_5, %c0_6] : memref<1x128xf32, #tpu.memory_space<vmem>>, vector<1x128xf32>
    %7 = vector.broadcast %6 : vector<1x128xf32> to vector<464x128xf32>
    %8 = arith.addf %5, %7 : vector<464x128xf32>
    %cst_7 = arith.constant 0.000000e+00 : f32
    %9 = vector.broadcast %cst_7 : f32 to vector<464x128xf32>
    %10 = arith.maximumf %8, %9 : vector<464x128xf32>
    %11 = arith.truncf %10 : vector<464x128xf32> to vector<464x128xbf16>
    %c0_8 = arith.constant 0 : index
    %c0_9 = arith.constant 0 : index
    %12 = vector.load %arg5[%c0_8, %c0_9] : memref<464x128xbf16, #tpu.memory_space<vmem>>, vector<464x128xbf16>
    tpu.vector_store %arg5[%c0_8, %c0_9], %11 {strides = array<i32>} : memref<464x128xbf16, #tpu.memory_space<vmem>>, vector<464x128xbf16>,
    return
  }
  func.func @transform_0(%arg0: i32) -> (i32, i32) {
    %c0_i32 = arith.constant 0 : i32
    %c0_i32_0 = arith.constant 0 : i32
    return %arg0, %c0_i32 : i32, i32
  }
  func.func @transform_1(%arg0: i32) -> (i32, i32) {
    %c0_i32 = arith.constant 0 : i32
    %c0_i32_0 = arith.constant 0 : i32
    %c0_i32_1 = arith.constant 0 : i32
    return %c0_i32, %c0_i32_0 : i32, i32
  }
  func.func @transform_2(%arg0: i32) -> (i32, i32) {
    %c0_i32 = arith.constant 0 : i32
    %c0_i32_0 = arith.constant 0 : i32
    %c0_i32_1 = arith.constant 0 : i32
    return %c0_i32, %c0_i32_0 : i32, i32
  }
  func.func @transform_3(%arg0: i32) -> (i32, i32) {
    %c0_i32 = arith.constant 0 : i32
    %c0_i32_0 = arith.constant 0 : i32
    %c0_i32_1 = arith.constant 0 : i32
    return %c0_i32, %c0_i32_0 : i32, i32
  }
  func.func @transform_4(%arg0: i32) -> (i32, i32) {
    %c0_i32 = arith.constant 0 : i32
    %c0_i32_0 = arith.constant 0 : i32
    return %arg0, %c0_i32 : i32, i32
  }
}

</mosaic_0001>

<llo_original>
// kernel: fused_matmul.1
$region0: #{fused_matmul.1}
  #allocation0 [shape = 'u32[]', space=smem, size = 0x4, offset = 0x4, fixed_abs, tag = 'smem constant byte address 0x4 - core index']
  #allocation1 [shape = 'u32[144,128]{1,0:T(1,128)}', space=vmem, size = 0x12000, scoped, tag = 'internal scratch']
  %s0 = inlined_call_operand.vmem [shape: bf16[2784,27], index: 0, kind: input, shape index: {}]
  %s1 = inlined_call_operand.vmem [shape: bf16[27,128], index: 1, kind: input, shape index: {}]
  %s2 = inlined_call_operand.vmem [shape: f32[1,128], index: 2, kind: input, shape index: {}]
  %s3 = inlined_call_operand.vmem [shape: f32[1,128], index: 3, kind: input, shape index: {}]
  %s4 = inlined_call_operand.vmem [shape: bf16[2784,128], index: 4, kind: output, shape index: {}]
  %s5 = sld [smem:[#allocation0]]
  $region49: #{fused_matmul.1} parent=0
    _
  %s7 = ssub.s32 1, %s5
  %s8 = scalar_select 0, %s7, %s5
  loop: start=0, step=1, limit=8
  $region2: #{fused_matmul.1} parent=0 // loop_pre_header
    _
  $region3: #{fused_matmul.1} parent=0 // loop_header
    %s10 = sphi 0, %s14
    %p11 = scmp.ge.s32.totalorder %s10, 8
    %s20 = sphi 0, %s22
    %s23 = sphi 0, %s20
    %s24 = sphi 0, %s23
    %s40 = sphi 0, %s24
    %s44 = sphi 0, %s44
    %s46 = sphi 0, %s44
    %s47 = sphi 0, %s46
    %s61 = sphi 0, %s47
    %s65 = sphi 0, %s65
    %s67 = sphi 0, %s65
    %s68 = sphi 0, %s67
    %s82 = sphi 0, %s68
    %s86 = sphi 0, %s86
    %s88 = sphi 0, %s86
    %s89 = sphi 0, %s88
    %s103 = sphi 0, %s89
    %s109 = sphi 0, %s111
    %s112 = sphi 0, %s109
    %s113 = sphi 0, %s112
    %s129 = sphi 0, %s113
  $region4: #{fused_matmul.1} parent=0 // loop_header_branch
    %13 = sbr.rel (%p11) target = $region8
  $region5: #{fused_matmul.1} parent=0 // loop_body
    %s15 = ssub.s32 %s10, 1
    %s16 = ssub.s32 %s10, 2
    %s17 = sadd.s32 %s10, 1
    %s18 = ssub.s32 %s10, %s17
    %p19 = scmp.eq.s32.totalorder %s18, 0
    %s21 = sadd.s32 %s20, 1
    %s22 = scalar_select %p19, %s20, %s21
    %p25 = pneg %p19
    %p26 = scmp.eq.s32.totalorder %s10, 5
    %p27 = por %p25, %p26
    %p28 = scmp.ne.s32.totalorder %s20, %s23
    %p29 = scmp.eq.s32.totalorder %s10, 0
    %p30 = por %p28, %p29
    %p31 = scmp.ne.s32.totalorder %s20, %s23
    %p32 = scmp.eq.s32.totalorder %s15, 5
    %p33 = por %p31, %p32
    %p34 = scmp.ne.s32.totalorder %s23, %s24
    %p35 = scmp.eq.s32.totalorder %s15, 0
    %p36 = por %p34, %p35
    %p37 = scmp.ne.s32.totalorder %s23, %s24
    %p38 = scmp.eq.s32.totalorder %s16, 5
    %p39 = por %p37, %p38
    %p41 = scmp.ne.s32.totalorder %s24, %s40
    %p42 = scmp.eq.s32.totalorder %s16, 0
    %p43 = por %p41, %p42
    %s45 = sadd.s32 %s44, 1
    %p48 = scmp.eq.s32.totalorder %s10, 5
    %p49 = scmp.ne.s32.totalorder %s44, %s46
    %p50 = scmp.eq.s32.totalorder %s10, 0
    %p51 = por %p49, %p50
    %p52 = scmp.ne.s32.totalorder %s44, %s46
    %p53 = scmp.eq.s32.totalorder %s15, 5
    %p54 = por %p52, %p53
    %p55 = scmp.ne.s32.totalorder %s46, %s47
    %p56 = scmp.eq.s32.totalorder %s15, 0
    %p57 = por %p55, %p56
    %p58 = scmp.ne.s32.totalorder %s46, %s47
    %p59 = scmp.eq.s32.totalorder %s16, 5
    %p60 = por %p58, %p59
    %p62 = scmp.ne.s32.totalorder %s47, %s61
    %p63 = scmp.eq.s32.totalorder %s16, 0
    %p64 = por %p62, %p63
    %s66 = sadd.s32 %s65, 1
    %p69 = scmp.eq.s32.totalorder %s10, 5
    %p70 = scmp.ne.s32.totalorder %s65, %s67
    %p71 = scmp.eq.s32.totalorder %s10, 0
    %p72 = por %p70, %p71
    %p73 = scmp.ne.s32.totalorder %s65, %s67
    %p74 = scmp.eq.s32.totalorder %s15, 5
    %p75 = por %p73, %p74
    %p76 = scmp.ne.s32.totalorder %s67, %s68
    %p77 = scmp.eq.s32.totalorder %s15, 0
    %p78 = por %p76, %p77
    %p79 = scmp.ne.s32.totalorder %s67, %s68
    %p80 = scmp.eq.s32.totalorder %s16, 5
    %p81 = por %p79, %p80
    %p83 = scmp.ne.s32.totalorder %s68, %s82
    %p84 = scmp.eq.s32.totalorder %s16, 0
    %p85 = por %p83, %p84
    %s87 = sadd.s32 %s86, 1
    %p90 = scmp.eq.s32.totalorder %s10, 5
    %p91 = scmp.ne.s32.totalorder %s86, %s88
    %p92 = scmp.eq.s32.totalorder %s10, 0
    %p93 = por %p91, %p92
    %p94 = scmp.ne.s32.totalorder %s86, %s88
    %p95 = scmp.eq.s32.totalorder %s15, 5
    %p96 = por %p94, %p95
    %p97 = scmp.ne.s32.totalorder %s88, %s89
    %p98 = scmp.eq.s32.totalorder %s15, 0
    %p99 = por %p97, %p98
    %p100 = scmp.ne.s32.totalorder %s88, %s89
    %p101 = scmp.eq.s32.totalorder %s16, 5
    %p102 = por %p100, %p101
    %p104 = scmp.ne.s32.totalorder %s89, %s103
    %p105 = scmp.eq.s32.totalorder %s16, 0
    %p106 = por %p104, %p105
    %s107 = ssub.s32 %s10, %s17
    %p108 = scmp.eq.s32.totalorder %s107, 0
    %s110 = sadd.s32 %s109, 1
    %s111 = scalar_select %p108, %s109, %s110
    %p114 = pneg %p108
    %p115 = scmp.eq.s32.totalorder %s10, 5
    %p116 = por %p114, %p115
    %p117 = scmp.ne.s32.totalorder %s109, %s112
    %p118 = scmp.eq.s32.totalorder %s10, 0
    %p119 = por %p117, %p118
    %p120 = scmp.ne.s32.totalorder %s109, %s112
    %p121 = scmp.eq.s32.totalorder %s15, 5
    %p122 = por %p120, %p121
    %p123 = scmp.ne.s32.totalorder %s112, %s113
    %p124 = scmp.eq.s32.totalorder %s15, 0
    %p125 = por %p123, %p124
    %p126 = scmp.ne.s32.totalorder %s112, %s113
    %p127 = scmp.eq.s32.totalorder %s16, 5
    %p128 = por %p126, %p127
    %p130 = scmp.ne.s32.totalorder %s113, %s129
    %p131 = scmp.eq.s32.totalorder %s16, 0
    %p132 = por %p130, %p131
    %p133 = scmp.le.s32.totalorder 1, %s10
    %p134 = scmp.lt.s32.totalorder %s10, 7
    %p135 = pnand %p133, %p134
    %p136 = pneg %p135
    // Predicated region
    $region9: #{fused_matmul.1} parent=5 // pred_check
      _
    $region10: #{fused_matmul.1} parent=5 // pred_check_branch
      %138 = sbr.rel (%p135) target = $region12
    $region11: #{fused_matmul.1} parent=5 // pred_region
      %s139 = ssub.s32 %s10, 1
      // Predicated region
      $region13: #{fused_matmul.1} parent=11 // pred_check
        %p140 = pneg %p57
      $region14: #{fused_matmul.1} parent=11 // pred_check_branch
        %142 = sbr.rel (%p140) target = $region16
      $region15: #{fused_matmul.1} parent=11 // pred_region
        _
      $region16: #{fused_matmul.1} parent=11 // pred_fallthru
        _
      // Predicated region
      $region17: #{fused_matmul.1} parent=11 // pred_check
        %p143 = pneg %p78
      $region18: #{fused_matmul.1} parent=11 // pred_check_branch
        %145 = sbr.rel (%p143) target = $region20
      $region19: #{fused_matmul.1} parent=11 // pred_region
        _
      $region20: #{fused_matmul.1} parent=11 // pred_fallthru
        _
      // Predicated region
      $region21: #{fused_matmul.1} parent=11 // pred_check
        %p146 = pneg %p99
      $region22: #{fused_matmul.1} parent=11 // pred_check_branch
        %148 = sbr.rel (%p146) target = $region24
      $region23: #{fused_matmul.1} parent=11 // pred_region
        _
      $region24: #{fused_matmul.1} parent=11 // pred_fallthru
        _
    $region12: #{fused_matmul.1} parent=5 // pred_fallthru
      _
    %p149 = scmp.lt.s32.totalorder %s10, 6
    // Predicated region
    $region25: #{fused_matmul.1} parent=5 // pred_check
      %p150 = pneg %p149
    $region26: #{fused_matmul.1} parent=5 // pred_check_branch
      %152 = sbr.rel (%p150) target = $region28
    $region27: #{fused_matmul.1} parent=5 // pred_region
      // Predicated region
      $region29: #{fused_matmul.1} parent=27 // pred_check
        %p153 = pneg %p30
      $region30: #{fused_matmul.1} parent=27 // pred_check_branch
        %155 = sbr.rel (%p153) target = $region32
      $region31: #{fused_matmul.1} parent=27 // pred_region
        %s156 = smul.u32 58, %s10
        %p157 = scmp.lt.s32.totalorder %s156, 347
        %s158 = scalar_select %p157, %s156, 347
        %s159 = smul.addr %s158, 4
        %s160 = scalar_lea.vmem %s0, %s159
        %s161 = smul.u32 58, %s10
      $region32: #{fused_matmul.1} parent=27 // pred_fallthru
        _
    $region28: #{fused_matmul.1} parent=5 // pred_fallthru
      _
    %p162 = scmp.le.s32.totalorder 1, %s10
    %p163 = scmp.lt.s32.totalorder %s10, 7
    %p164 = pnand %p162, %p163
    %p165 = pneg %p164
    // Predicated region
    $region33: #{fused_matmul.1} parent=5 // pred_check
      _
    $region34: #{fused_matmul.1} parent=5 // pred_check_branch
      %167 = sbr.rel (%p164) target = $region36
    $region35: #{fused_matmul.1} parent=5 // pred_region
      %s168 = ssub.s32 %s10, 1
      %s169 = smul.u32 58, %s15
      %p170 = scmp.lt.s32.totalorder %s169, 347
      %s171 = scalar_select %p170, %s169, 347
      %s172 = smul.addr %s171, 4
      %s173 = scalar_lea.vmem %s0, %s172
      %p174 = pneg %p36
      %p175 = pneg %p33
      %p176 = pneg %p57
      %p177 = pneg %p54
      %p178 = pneg %p78
      %p179 = pneg %p75
      %p180 = pneg %p99
      %p181 = pneg %p96
      %p182 = pneg %p125
      %p183 = pneg %p122
      %s184 = smul.u32 58, %s15
      %p185 = scmp.lt.s32.totalorder %s184, 347
      %s186 = scalar_select %p185, %s184, 347
      %s187 = smul.addr %s186, 4
      %s188 = scalar_lea.vmem %s4, %s187
      %s189 = smul.u32 58, %s15
      %p190 = scmp.lt.s32.totalorder %s189, 347
      %s191 = scalar_select %p190, %s189, 347
      %s192 = smul.addr %s191, 4
      %s193 = scalar_lea.vmem %s0, %s192
      %s194 = smul.u32 58, %s15
      %s195 = smul.u32 58, %s15
      %p196 = scmp.lt.s32.totalorder %s195, 347
      %s197 = scalar_select %p196, %s195, 347
      %s198 = smul.addr %s197, 4
      %s199 = scalar_lea.vmem %s4, %s198
      %s200 = smul.u32 58, %s15
      %v202 = vld [vmem:[%s193] sm:$0xf]
      %v203 = vld [vmem:[%s193 + $0x4] sm:$0xf]
      %v204 = vld [vmem:[%s193 + $0x8] sm:$0xf]
      %v205 = vld [vmem:[%s193 + $0xc] sm:$0xf]
      %v206 = vld [vmem:[%s193 + $0x10] sm:$0xf]
      %v207 = vld [vmem:[%s193 + $0x14] sm:$0xf]
      %v208 = vld [vmem:[%s193 + $0x18] sm:$0xf]
      %v209 = vld [vmem:[%s193 + $0x1c] sm:$0xf]
      %v210 = vld [vmem:[%s193 + $0x20] sm:$0xf]
      %v211 = vld [vmem:[%s193 + $0x24] sm:$0xf]
      %v212 = vld [vmem:[%s193 + $0x28] sm:$0xf]
      %v213 = vld [vmem:[%s193 + $0x2c] sm:$0xf]
      %v214 = vld [vmem:[%s193 + $0x30] sm:$0xf]
      %v215 = vld [vmem:[%s193 + $0x34] sm:$0xf]
      %v216 = vld [vmem:[%s193 + $0x38] sm:$0xf]
      %v217 = vld [vmem:[%s193 + $0x3c] sm:$0xf]
      %v218 = vld [vmem:[%s193 + $0x40] sm:$0xf]
      %v219 = vld [vmem:[%s193 + $0x44] sm:$0xf]
      %v220 = vld [vmem:[%s193 + $0x48] sm:$0xf]
      %v221 = vld [vmem:[%s193 + $0x4c] sm:$0xf]
      %v222 = vld [vmem:[%s193 + $0x50] sm:$0xf]
      %v223 = vld [vmem:[%s193 + $0x54] sm:$0xf]
      %v224 = vld [vmem:[%s193 + $0x58] sm:$0xf]
      %v225 = vld [vmem:[%s193 + $0x5c] sm:$0xf]
      %v226 = vld [vmem:[%s193 + $0x60] sm:$0xf]
      %v227 = vld [vmem:[%s193 + $0x64] sm:$0xf]
      %v228 = vld [vmem:[%s193 + $0x68] sm:$0xf]
      %v229 = vld [vmem:[%s193 + $0x6c] sm:$0xf]
      %v230 = vld [vmem:[%s193 + $0x70] sm:$0xf]
      %v231 = vld [vmem:[%s193 + $0x74] sm:$0xf]
      %v232 = vld [vmem:[%s193 + $0x78] sm:$0xf]
      %v233 = vld [vmem:[%s193 + $0x7c] sm:$0xf]
      %v234 = vld [vmem:[%s193 + $0x80] sm:$0xf]
      %v235 = vld [vmem:[%s193 + $0x84] sm:$0xf]
      %v236 = vld [vmem:[%s193 + $0x88] sm:$0xf]
      %v237 = vld [vmem:[%s193 + $0x8c] sm:$0xf]
      %v238 = vld [vmem:[%s193 + $0x90] sm:$0xf]
      %v239 = vld [vmem:[%s193 + $0x94] sm:$0xf]
      %v240 = vld [vmem:[%s193 + $0x98] sm:$0xf]
      %v241 = vld [vmem:[%s193 + $0x9c] sm:$0xf]
      %v242 = vld [vmem:[%s193 + $0xa0] sm:$0xf]
      %v243 = vld [vmem:[%s193 + $0xa4] sm:$0xf]
      %v244 = vld [vmem:[%s193 + $0xa8] sm:$0xf]
      %v245 = vld [vmem:[%s193 + $0xac] sm:$0xf]
      %v246 = vld [vmem:[%s193 + $0xb0] sm:$0xf]
      %v247 = vld [vmem:[%s193 + $0xb4] sm:$0xf]
      %v248 = vld [vmem:[%s193 + $0xb8] sm:$0xf]
      %v249 = vld [vmem:[%s193 + $0xbc] sm:$0xf]
      %v250 = vld [vmem:[%s193 + $0xc0] sm:$0xf]
      %v251 = vld [vmem:[%s193 + $0xc4] sm:$0xf]
      %v252 = vld [vmem:[%s193 + $0xc8] sm:$0xf]
      %v253 = vld [vmem:[%s193 + $0xcc] sm:$0xf]
      %v254 = vld [vmem:[%s193 + $0xd0] sm:$0xf]
      %v255 = vld [vmem:[%s193 + $0xd4] sm:$0xf]
      %v256 = vld [vmem:[%s193 + $0xd8] sm:$0xf]
      %v257 = vld [vmem:[%s193 + $0xdc] sm:$0xf]
      %v258 = vld [vmem:[%s193 + $0xe0] sm:$0xf]
      %v259 = vld [vmem:[%s193 + $0xe4] sm:$0xf]
      %v260 = vld [vmem:[%s1] sm:$0xf]
      %v261 = vld [vmem:[%s1 + $0x4] sm:$0xf]
      %v262 = vld [vmem:[%s1 + $0x8] sm:$0xf]
      %v263 = vld [vmem:[%s1 + $0xc] sm:$0x3]
      %v322 = vunpack.c.l.b16 %v202
      %v323 = vunpack.c.l.b16 %v203
      %v324 = vunpack.c.l.b16 %v204
      %v325 = vunpack.c.l.b16 %v205
      %v326 = vunpack.c.l.b16 %v206
      %v327 = vunpack.c.l.b16 %v207
      %v328 = vunpack.c.l.b16 %v208
      %v329 = vunpack.c.l.b16 %v209
      %v330 = vunpack.c.l.b16 %v210
      %v331 = vunpack.c.l.b16 %v211
      %v332 = vunpack.c.l.b16 %v212
      %v333 = vunpack.c.l.b16 %v213
      %v334 = vunpack.c.l.b16 %v214
      %v335 = vunpack.c.l.b16 %v215
      %v336 = vunpack.c.l.b16 %v216
      %v337 = vunpack.c.l.b16 %v217
      %v338 = vunpack.c.l.b16 %v218
      %v339 = vunpack.c.l.b16 %v219
      %v340 = vunpack.c.l.b16 %v220
      %v341 = vunpack.c.l.b16 %v221
      %v342 = vunpack.c.l.b16 %v222
      %v343 = vunpack.c.l.b16 %v223
      %v344 = vunpack.c.l.b16 %v224
      %v345 = vunpack.c.l.b16 %v225
      %v346 = vunpack.c.l.b16 %v226
      %v347 = vunpack.c.l.b16 %v227
      %v348 = vunpack.c.l.b16 %v228
      %v349 = vunpack.c.l.b16 %v229
      %v350 = vunpack.c.l.b16 %v230
      %v351 = vunpack.c.l.b16 %v231
      %v352 = vunpack.c.l.b16 %v232
      %v353 = vunpack.c.l.b16 %v233
      %v354 = vunpack.c.l.b16 %v234
      %v355 = vunpack.c.l.b16 %v235
      %v356 = vunpack.c.l.b16 %v236
      %v357 = vunpack.c.l.b16 %v237
      %v358 = vunpack.c.l.b16 %v238
      %v359 = vunpack.c.l.b16 %v239
      %v360 = vunpack.c.l.b16 %v240
      %v361 = vunpack.c.l.b16 %v241
      %v362 = vunpack.c.l.b16 %v242
      %v363 = vunpack.c.l.b16 %v243
      %v364 = vunpack.c.l.b16 %v244
      %v365 = vunpack.c.l.b16 %v245
      %v366 = vunpack.c.l.b16 %v246
      %v367 = vunpack.c.l.b16 %v247
      %v368 = vunpack.c.l.b16 %v248
      %v369 = vunpack.c.l.b16 %v249
      %v370 = vunpack.c.l.b16 %v250
      %v371 = vunpack.c.l.b16 %v251
      %v372 = vunpack.c.l.b16 %v252
      %v373 = vunpack.c.l.b16 %v253
      %v374 = vunpack.c.l.b16 %v254
      %v375 = vunpack.c.l.b16 %v255
      %v376 = vunpack.c.l.b16 %v256
      %v377 = vunpack.c.l.b16 %v257
      %v378 = vunpack.c.l.b16 %v258
      %v379 = vunpack.c.l.b16 %v259
      %v380 = vpack.c.b16 %v323, %v322
      %v381 = vpack.c.b16 %v325, %v324
      %v382 = vpack.c.b16 %v327, %v326
      %v383 = vpack.c.b16 %v329, %v328
      %v384 = vpack.c.b16 %v331, %v330
      %v385 = vpack.c.b16 %v333, %v332
      %v386 = vpack.c.b16 %v335, %v334
      %v387 = vpack.c.b16 %v337, %v336
      %v388 = vpack.c.b16 %v339, %v338
      %v389 = vpack.c.b16 %v341, %v340
      %v390 = vpack.c.b16 %v343, %v342
      %v391 = vpack.c.b16 %v345, %v344
      %v392 = vpack.c.b16 %v347, %v346
      %v393 = vpack.c.b16 %v349, %v348
      %v394 = vpack.c.b16 %v351, %v350
      %v395 = vpack.c.b16 %v353, %v352
      %v396 = vpack.c.b16 %v355, %v354
      %v397 = vpack.c.b16 %v357, %v356
      %v398 = vpack.c.b16 %v359, %v358
      %v399 = vpack.c.b16 %v361, %v360
      %v400 = vpack.c.b16 %v363, %v362
      %v401 = vpack.c.b16 %v365, %v364
      %v402 = vpack.c.b16 %v367, %v366
      %v403 = vpack.c.b16 %v369, %v368
      %v404 = vpack.c.b16 %v371, %v370
      %v405 = vpack.c.b16 %v373, %v372
      %v406 = vpack.c.b16 %v375, %v374
      %v407 = vpack.c.b16 %v377, %v376
      %v408 = vpack.c.b16 %v379, %v378
      %v413 = vunpack.c.l.b16 %v260
      %v414 = vunpack.c.l.b16 %v261
      %v415 = vunpack.c.l.b16 %v262
      %v416 = vunpack.c.l.b16 %v263
      %v417 = vpack.c.b16 %v414, %v413
      %v418 = vpack.c.b16 %v416, %v415
      %vm420 = vcmask 220160
      %v422 = vsel %vm420, %v380, 0
      %v425 = vsel %vm420, %v381, 0
      %v428 = vsel %vm420, %v382, 0
      %v431 = vsel %vm420, %v383, 0
      %v434 = vsel %vm420, %v384, 0
      %v437 = vsel %vm420, %v385, 0
      %v440 = vsel %vm420, %v386, 0
      %v443 = vsel %vm420, %v387, 0
      %v446 = vsel %vm420, %v388, 0
      %v449 = vsel %vm420, %v389, 0
      %v452 = vsel %vm420, %v390, 0
      %v455 = vsel %vm420, %v391, 0
      %v458 = vsel %vm420, %v392, 0
      %v461 = vsel %vm420, %v393, 0
      %v464 = vsel %vm420, %v394, 0
      %v467 = vsel %vm420, %v395, 0
      %v470 = vsel %vm420, %v396, 0
      %v473 = vsel %vm420, %v397, 0
      %v476 = vsel %vm420, %v398, 0
      %v479 = vsel %vm420, %v399, 0
      %v482 = vsel %vm420, %v400, 0
      %v485 = vsel %vm420, %v401, 0
      %v488 = vsel %vm420, %v402, 0
      %v491 = vsel %vm420, %v403, 0
      %v494 = vsel %vm420, %v404, 0
      %v497 = vsel %vm420, %v405, 0
      %v500 = vsel %vm420, %v406, 0
      %v503 = vsel %vm420, %v407, 0
      %v506 = vsel %vm420, %v408, 0
      %vm508 = vcmask 1044480
      %vm509 = vcmask 1045504
      %v510 = vsel %vm508, 4294967295, 65535
      %v511 = vsel %vm509, %v510, 0
      %v513 = vand.u32 %v418, %v511
      %515 = vmatprep.subr.bf16.mxu0 0
      %516 = vmatpush1.bf16.msra.mxu0 %v417
      %517 = vmatprep.subr.bf16.mxu0 0
      %518 = vmatpush1.bf16.msra.mxu0 %v513
      %519 = vmatprep.subr.bf16.mxu0 0
      %520 = vmatpush1.bf16.msra.mxu0 0
      %521 = vmatprep.subr.bf16.mxu0 0
      %522 = vmatpush1.bf16.msra.mxu0 0
      %523 = vmatprep.subr.bf16.mxu0 0
      %524 = vmatpush1.bf16.msra.mxu0 0
      %525 = vmatprep.subr.bf16.mxu0 0
      %526 = vmatpush1.bf16.msra.mxu0 0
      %527 = vmatprep.subr.bf16.mxu0 0
      %528 = vmatpush1.bf16.msra.mxu0 0
      %529 = vmatprep.subr.bf16.mxu0 0
      %530 = vmatpush1.bf16.msra.mxu0 0
      %531 = vmatprep.subr.bf16.mxu0 0
      %532 = vmatpush1.bf16.msra.mxu0 0
      %533 = vmatprep.subr.bf16.mxu0 0
      %534 = vmatpush1.bf16.msra.mxu0 0
      %535 = vmatprep.subr.bf16.mxu0 0
      %536 = vmatpush1.bf16.msra.mxu0 0
      %537 = vmatprep.subr.bf16.mxu0 0
      %538 = vmatpush1.bf16.msra.mxu0 0
      %539 = vmatprep.subr.bf16.mxu0 0
      %540 = vmatpush1.bf16.msra.mxu0 0
      %541 = vmatprep.subr.bf16.mxu0 0
      %542 = vmatpush1.bf16.msra.mxu0 0
      %543 = vmatprep.subr.bf16.mxu0 0
      %544 = vmatpush1.bf16.msra.mxu0 0
      %545 = vmatprep.subr.bf16.mxu0 0
      %546 = vmatpush1.bf16.msra.mxu0 0
      %547 = vmatprep.mubr.bf16.mxu0 0
      %548 = vmatmul.mubr.bf16.gmra.mrb[0].mxu0 %v422
      %v549 = vpop.f32.mrb[0].mxu0
      %v550 = vadd.f32 0.0, %v549
      %v551 = vpop.f32.mrb[0].mxu0
      %v552 = vpop.f32.mrb[0].mxu0
      %v553 = vadd.f32 0.0, %v552
      %v554 = vpop.f32.mrb[0].mxu0
      %555 = vmatprep.mubr.bf16.mxu0 0
      %556 = vmatmul.mubr.bf16.gmra.mrb[0].mxu0 %v425
      %v557 = vpop.f32.mrb[0].mxu0
      %v558 = vadd.f32 0.0, %v557
      %v559 = vpop.f32.mrb[0].mxu0
      %v560 = vpop.f32.mrb[0].mxu0
      %v561 = vadd.f32 0.0, %v560
      %v562 = vpop.f32.mrb[0].mxu0
      %563 = vmatprep.mubr.bf16.mxu0 0
      %564 = vmatmul.mubr.bf16.gmra.mrb[0].mxu0 %v428
      %v565 = vpop.f32.mrb[0].mxu0
      %v566 = vadd.f32 0.0, %v565
      %v567 = vpop.f32.mrb[0].mxu0
      %v568 = vpop.f32.mrb[0].mxu0
      %v569 = vadd.f32 0.0, %v568
      %v570 = vpop.f32.mrb[0].mxu0
      %571 = vmatprep.mubr.bf16.mxu0 0
      %572 = vmatmul.mubr.bf16.gmra.mrb[0].mxu0 %v431
      %v573 = vpop.f32.mrb[0].mxu0
      %v574 = vadd.f32 0.0, %v573
      %v575 = vpop.f32.mrb[0].mxu0
      %v576 = vpop.f32.mrb[0].mxu0
      %v577 = vadd.f32 0.0, %v576
      %v578 = vpop.f32.mrb[0].mxu0
      %579 = vmatprep.mubr.bf16.mxu0 0
      %580 = vmatmul.mubr.bf16.gmra.mrb[0].mxu0 %v434
      %v581 = vpop.f32.mrb[0].mxu0
      %v582 = vadd.f32 0.0, %v581
      %v583 = vpop.f32.mrb[0].mxu0
      %v584 = vpop.f32.mrb[0].mxu0
      %v585 = vadd.f32 0.0, %v584
      %v586 = vpop.f32.mrb[0].mxu0
      %587 = vmatprep.mubr.bf16.mxu0 0
      %588 = vmatmul.mubr.bf16.gmra.mrb[0].mxu0 %v437
      %v589 = vpop.f32.mrb[0].mxu0
      %v590 = vadd.f32 0.0, %v589
      %v591 = vpop.f32.mrb[0].mxu0
      %v592 = vpop.f32.mrb[0].mxu0
      %v593 = vadd.f32 0.0, %v592
      %v594 = vpop.f32.mrb[0].mxu0
      %595 = vmatprep.mubr.bf16.mxu0 0
      %596 = vmatmul.mubr.bf16.gmra.mrb[0].mxu0 %v440
      %v597 = vpop.f32.mrb[0].mxu0
      %v598 = vadd.f32 0.0, %v597
      %v599 = vpop.f32.mrb[0].mxu0
      %v600 = vpop.f32.mrb[0].mxu0
      %v601 = vadd.f32 0.0, %v600
      %v602 = vpop.f32.mrb[0].mxu0
      %603 = vmatprep.mubr.bf16.mxu0 0
      %604 = vmatmul.mubr.bf16.gmra.mrb[0].mxu0 %v443
      %v605 = vpop.f32.mrb[0].mxu0
      %v606 = vadd.f32 0.0, %v605
      %v607 = vpop.f32.mrb[0].mxu0
      %v608 = vpop.f32.mrb[0].mxu0
      %v609 = vadd.f32 0.0, %v608
      %v610 = vpop.f32.mrb[0].mxu0
      %611 = vmatprep.mubr.bf16.mxu0 0
      %612 = vmatmul.mubr.bf16.gmra.mrb[0].mxu0 %v446
      %v613 = vpop.f32.mrb[0].mxu0
      %v614 = vadd.f32 0.0, %v613
      %v615 = vpop.f32.mrb[0].mxu0
      %v616 = vpop.f32.mrb[0].mxu0
      %v617 = vadd.f32 0.0, %v616
      %v618 = vpop.f32.mrb[0].mxu0
      %619 = vmatprep.mubr.bf16.mxu0 0
      %620 = vmatmul.mubr.bf16.gmra.mrb[0].mxu0 %v449
      %v621 = vpop.f32.mrb[0].mxu0
      %v622 = vadd.f32 0.0, %v621
      %v623 = vpop.f32.mrb[0].mxu0
      %v624 = vpop.f32.mrb[0].mxu0
      %v625 = vadd.f32 0.0, %v624
      %v626 = vpop.f32.mrb[0].mxu0
      %627 = vmatprep.mubr.bf16.mxu0 0
      %628 = vmatmul.mubr.bf16.gmra.mrb[0].mxu0 %v452
      %v629 = vpop.f32.mrb[0].mxu0
      %v630 = vadd.f32 0.0, %v629
      %v631 = vpop.f32.mrb[0].mxu0
      %v632 = vpop.f32.mrb[0].mxu0
      %v633 = vadd.f32 0.0, %v632
      %v634 = vpop.f32.mrb[0].mxu0
      %635 = vmatprep.mubr.bf16.mxu0 0
      %636 = vmatmul.mubr.bf16.gmra.mrb[0].mxu0 %v455
      %v637 = vpop.f32.mrb[0].mxu0
      %v638 = vadd.f32 0.0, %v637
      %v639 = vpop.f32.mrb[0].mxu0
      %v640 = vpop.f32.mrb[0].mxu0
      %v641 = vadd.f32 0.0, %v640
      %v642 = vpop.f32.mrb[0].mxu0
      %643 = vmatprep.mubr.bf16.mxu0 0
      %644 = vmatmul.mubr.bf16.gmra.mrb[0].mxu0 %v458
      %v645 = vpop.f32.mrb[0].mxu0
      %v646 = vadd.f32 0.0, %v645
      %v647 = vpop.f32.mrb[0].mxu0
      %v648 = vpop.f32.mrb[0].mxu0
      %v649 = vadd.f32 0.0, %v648
      %v650 = vpop.f32.mrb[0].mxu0
      %651 = vmatprep.mubr.bf16.mxu0 0
      %652 = vmatmul.mubr.bf16.gmra.mrb[0].mxu0 %v461
      %v653 = vpop.f32.mrb[0].mxu0
      %v654 = vadd.f32 0.0, %v653
      %v655 = vpop.f32.mrb[0].mxu0
      %v656 = vpop.f32.mrb[0].mxu0
      %v657 = vadd.f32 0.0, %v656
      %v658 = vpop.f32.mrb[0].mxu0
      %659 = vmatprep.mubr.bf16.mxu0 0
      %660 = vmatmul.mubr.bf16.gmra.mrb[0].mxu0 %v464
      %v661 = vpop.f32.mrb[0].mxu0
      %v662 = vadd.f32 0.0, %v661
      %v663 = vpop.f32.mrb[0].mxu0
      %v664 = vpop.f32.mrb[0].mxu0
      %v665 = vadd.f32 0.0, %v664
      %v666 = vpop.f32.mrb[0].mxu0
      %667 = vmatprep.mubr.bf16.mxu0 0
      %668 = vmatmul.mubr.bf16.gmra.mrb[0].mxu0 %v467
      %v669 = vpop.f32.mrb[0].mxu0
      %v670 = vadd.f32 0.0, %v669
      %v671 = vpop.f32.mrb[0].mxu0
      %v672 = vpop.f32.mrb[0].mxu0
      %v673 = vadd.f32 0.0, %v672
      %v674 = vpop.f32.mrb[0].mxu0
      %675 = vmatprep.mubr.bf16.mxu0 0
      %676 = vmatmul.mubr.bf16.gmra.mrb[0].mxu0 %v470
      %v677 = vpop.f32.mrb[0].mxu0
      %v678 = vadd.f32 0.0, %v677
      %v679 = vpop.f32.mrb[0].mxu0
      %v680 = vpop.f32.mrb[0].mxu0
      %v681 = vadd.f32 0.0, %v680
      %v682 = vpop.f32.mrb[0].mxu0
      %683 = vmatprep.mubr.bf16.mxu0 0
      %684 = vmatmul.mubr.bf16.gmra.mrb[0].mxu0 %v473
      %v685 = vpop.f32.mrb[0].mxu0
      %v686 = vadd.f32 0.0, %v685
      %v687 = vpop.f32.mrb[0].mxu0
      %v688 = vpop.f32.mrb[0].mxu0
      %v689 = vadd.f32 0.0, %v688
      %v690 = vpop.f32.mrb[0].mxu0
      %691 = vmatprep.mubr.bf16.mxu0 0
      %692 = vmatmul.mubr.bf16.gmra.mrb[0].mxu0 %v476
      %v693 = vpop.f32.mrb[0].mxu0
      %v694 = vadd.f32 0.0, %v693
      %v695 = vpop.f32.mrb[0].mxu0
      %v696 = vpop.f32.mrb[0].mxu0
      %v697 = vadd.f32 0.0, %v696
      %v698 = vpop.f32.mrb[0].mxu0
      %699 = vmatprep.mubr.bf16.mxu0 0
      %700 = vmatmul.mubr.bf16.gmra.mrb[0].mxu0 %v479
      %v701 = vpop.f32.mrb[0].mxu0
      %v702 = vadd.f32 0.0, %v701
      %v703 = vpop.f32.mrb[0].mxu0
      %v704 = vpop.f32.mrb[0].mxu0
      %v705 = vadd.f32 0.0, %v704
      %v706 = vpop.f32.mrb[0].mxu0
      %707 = vmatprep.mubr.bf16.mxu0 0
      %708 = vmatmul.mubr.bf16.gmra.mrb[0].mxu0 %v482
      %v709 = vpop.f32.mrb[0].mxu0
      %v710 = vadd.f32 0.0, %v709
      %v711 = vpop.f32.mrb[0].mxu0
      %v712 = vpop.f32.mrb[0].mxu0
      %v713 = vadd.f32 0.0, %v712
      %v714 = vpop.f32.mrb[0].mxu0
      %715 = vmatprep.mubr.bf16.mxu0 0
      %716 = vmatmul.mubr.bf16.gmra.mrb[0].mxu0 %v485
      %v717 = vpop.f32.mrb[0].mxu0
      %v718 = vadd.f32 0.0, %v717
      %v719 = vpop.f32.mrb[0].mxu0
      %v720 = vpop.f32.mrb[0].mxu0
      %v721 = vadd.f32 0.0, %v720
      %v722 = vpop.f32.mrb[0].mxu0
      %723 = vmatprep.mubr.bf16.mxu0 0
      %724 = vmatmul.mubr.bf16.gmra.mrb[0].mxu0 %v488
      %v725 = vpop.f32.mrb[0].mxu0
      %v726 = vadd.f32 0.0, %v725
      %v727 = vpop.f32.mrb[0].mxu0
      %v728 = vpop.f32.mrb[0].mxu0
      %v729 = vadd.f32 0.0, %v728
      %v730 = vpop.f32.mrb[0].mxu0
      %731 = vmatprep.mubr.bf16.mxu0 0
      %732 = vmatmul.mubr.bf16.gmra.mrb[0].mxu0 %v491
      %v733 = vpop.f32.mrb[0].mxu0
      %v734 = vadd.f32 0.0, %v733
      %v735 = vpop.f32.mrb[0].mxu0
      %v736 = vpop.f32.mrb[0].mxu0
      %v737 = vadd.f32 0.0, %v736
      %v738 = vpop.f32.mrb[0].mxu0
      %739 = vmatprep.mubr.bf16.mxu0 0
      %740 = vmatmul.mubr.bf16.gmra.mrb[0].mxu0 %v494
      %v741 = vpop.f32.mrb[0].mxu0
      %v742 = vadd.f32 0.0, %v741
      %v743 = vpop.f32.mrb[0].mxu0
      %v744 = vpop.f32.mrb[0].mxu0
      %v745 = vadd.f32 0.0, %v744
      %v746 = vpop.f32.mrb[0].mxu0
      %747 = vmatprep.mubr.bf16.mxu0 0
      %748 = vmatmul.mubr.bf16.gmra.mrb[0].mxu0 %v497
      %v749 = vpop.f32.mrb[0].mxu0
      %v750 = vadd.f32 0.0, %v749
      %v751 = vpop.f32.mrb[0].mxu0
      %v752 = vpop.f32.mrb[0].mxu0
      %v753 = vadd.f32 0.0, %v752
      %v754 = vpop.f32.mrb[0].mxu0
      %755 = vmatprep.mubr.bf16.mxu0 0
      %756 = vmatmul.mubr.bf16.gmra.mrb[0].mxu0 %v500
      %v757 = vpop.f32.mrb[0].mxu0
      %v758 = vadd.f32 0.0, %v757
      %v759 = vpop.f32.mrb[0].mxu0
      %v760 = vpop.f32.mrb[0].mxu0
      %v761 = vadd.f32 0.0, %v760
      %v762 = vpop.f32.mrb[0].mxu0
      %763 = vmatprep.mubr.bf16.mxu0 0
      %764 = vmatmul.mubr.bf16.gmra.mrb[0].mxu0 %v503
      %v765 = vpop.f32.mrb[0].mxu0
      %v766 = vadd.f32 0.0, %v765
      %v767 = vpop.f32.mrb[0].mxu0
      %v768 = vpop.f32.mrb[0].mxu0
      %v769 = vadd.f32 0.0, %v768
      %v770 = vpop.f32.mrb[0].mxu0
      %771 = vmatprep.mubr.bf16.mxu0 0
      %772 = vmatmul.mubr.bf16.gmra.mrb[0].mxu0 %v506
      %v773 = vpop.f32.mrb[0].mxu0
      %v774 = vadd.f32 0.0, %v773
      %v775 = vpop.f32.mrb[0].mxu0
      %v776 = vpop.f32.mrb[0].mxu0
      %v777 = vadd.f32 0.0, %v776
      %v778 = vpop.f32.mrb[0].mxu0
      %779 = vdwg.mxu0
      %v780 = vld [vmem:[%s2] sm:$0x1]
      %v782 = vlaneseq
      %v783 = vshrl.u32 %v782, 7
      %v784 = vsub.s32 0, %v783
      %v785 = vrot.slane %v780, %v784
      %v787 = vmul.f32 %v550, %v785
      %v788 = vmul.f32 %v553, %v785
      %v789 = vmul.f32 %v558, %v785
      %v790 = vmul.f32 %v561, %v785
      %v791 = vmul.f32 %v566, %v785
      %v792 = vmul.f32 %v569, %v785
      %v793 = vmul.f32 %v574, %v785
      %v794 = vmul.f32 %v577, %v785
      %v795 = vmul.f32 %v582, %v785
      %v796 = vmul.f32 %v585, %v785
      %v797 = vmul.f32 %v590, %v785
      %v798 = vmul.f32 %v593, %v785
      %v799 = vmul.f32 %v598, %v785
      %v800 = vmul.f32 %v601, %v785
      %v801 = vmul.f32 %v606, %v785
      %v802 = vmul.f32 %v609, %v785
      %v803 = vmul.f32 %v614, %v785
      %v804 = vmul.f32 %v617, %v785
      %v805 = vmul.f32 %v622, %v785
      %v806 = vmul.f32 %v625, %v785
      %v807 = vmul.f32 %v630, %v785
      %v808 = vmul.f32 %v633, %v785
      %v809 = vmul.f32 %v638, %v785
      %v810 = vmul.f32 %v641, %v785
      %v811 = vmul.f32 %v646, %v785
      %v812 = vmul.f32 %v649, %v785
      %v813 = vmul.f32 %v654, %v785
      %v814 = vmul.f32 %v657, %v785
      %v815 = vmul.f32 %v662, %v785
      %v816 = vmul.f32 %v665, %v785
      %v817 = vmul.f32 %v670, %v785
      %v818 = vmul.f32 %v673, %v785
      %v819 = vmul.f32 %v678, %v785
      %v820 = vmul.f32 %v681, %v785
      %v821 = vmul.f32 %v686, %v785
      %v822 = vmul.f32 %v689, %v785
      %v823 = vmul.f32 %v694, %v785
      %v824 = vmul.f32 %v697, %v785
      %v825 = vmul.f32 %v702, %v785
      %v826 = vmul.f32 %v705, %v785
      %v827 = vmul.f32 %v710, %v785
      %v828 = vmul.f32 %v713, %v785
      %v829 = vmul.f32 %v718, %v785
      %v830 = vmul.f32 %v721, %v785
      %v831 = vmul.f32 %v726, %v785
      %v832 = vmul.f32 %v729, %v785
      %v833 = vmul.f32 %v734, %v785
      %v834 = vmul.f32 %v737, %v785
      %v835 = vmul.f32 %v742, %v785
      %v836 = vmul.f32 %v745, %v785
      %v837 = vmul.f32 %v750, %v785
      %v838 = vmul.f32 %v753, %v785
      %v839 = vmul.f32 %v758, %v785
      %v840 = vmul.f32 %v761, %v785
      %v841 = vmul.f32 %v766, %v785
      %v842 = vmul.f32 %v769, %v785
      %v843 = vmul.f32 %v774, %v785
      %v844 = vmul.f32 %v777, %v785
      %v845 = vld [vmem:[%s3] sm:$0x1]
      %v847 = vlaneseq
      %v848 = vshrl.u32 %v847, 7
      %v849 = vsub.s32 0, %v848
      %v850 = vrot.slane %v845, %v849
      %v852 = vadd.f32 %v787, %v850
      %v853 = vadd.f32 %v788, %v850
      %v854 = vadd.f32 %v789, %v850
      %v855 = vadd.f32 %v790, %v850
      %v856 = vadd.f32 %v791, %v850
      %v857 = vadd.f32 %v792, %v850
      %v858 = vadd.f32 %v793, %v850
      %v859 = vadd.f32 %v794, %v850
      %v860 = vadd.f32 %v795, %v850
      %v861 = vadd.f32 %v796, %v850
      %v862 = vadd.f32 %v797, %v850
      %v863 = vadd.f32 %v798, %v850
      %v864 = vadd.f32 %v799, %v850
      %v865 = vadd.f32 %v800, %v850
      %v866 = vadd.f32 %v801, %v850
      %v867 = vadd.f32 %v802, %v850
      %v868 = vadd.f32 %v803, %v850
      %v869 = vadd.f32 %v804, %v850
      %v870 = vadd.f32 %v805, %v850
      %v871 = vadd.f32 %v806, %v850
      %v872 = vadd.f32 %v807, %v850
      %v873 = vadd.f32 %v808, %v850
      %v874 = vadd.f32 %v809, %v850
      %v875 = vadd.f32 %v810, %v850
      %v876 = vadd.f32 %v811, %v850
      %v877 = vadd.f32 %v812, %v850
      %v878 = vadd.f32 %v813, %v850
      %v879 = vadd.f32 %v814, %v850
      %v880 = vadd.f32 %v815, %v850
      %v881 = vadd.f32 %v816, %v850
      %v882 = vadd.f32 %v817, %v850
      %v883 = vadd.f32 %v818, %v850
      %v884 = vadd.f32 %v819, %v850
      %v885 = vadd.f32 %v820, %v850
      %v886 = vadd.f32 %v821, %v850
      %v887 = vadd.f32 %v822, %v850
      %v888 = vadd.f32 %v823, %v850
      %v889 = vadd.f32 %v824, %v850
      %v890 = vadd.f32 %v825, %v850
      %v891 = vadd.f32 %v826, %v850
      %v892 = vadd.f32 %v827, %v850
      %v893 = vadd.f32 %v828, %v850
      %v894 = vadd.f32 %v829, %v850
      %v895 = vadd.f32 %v830, %v850
      %v896 = vadd.f32 %v831, %v850
      %v897 = vadd.f32 %v832, %v850
      %v898 = vadd.f32 %v833, %v850
      %v899 = vadd.f32 %v834, %v850
      %v900 = vadd.f32 %v835, %v850
      %v901 = vadd.f32 %v836, %v850
      %v902 = vadd.f32 %v837, %v850
      %v903 = vadd.f32 %v838, %v850
      %v904 = vadd.f32 %v839, %v850
      %v905 = vadd.f32 %v840, %v850
      %v906 = vadd.f32 %v841, %v850
      %v907 = vadd.f32 %v842, %v850
      %v908 = vadd.f32 %v843, %v850
      %v909 = vadd.f32 %v844, %v850
      %v910 = vmax.f32 %v852, 0.0
      %v911 = vmax.f32 %v853, 0.0
      %v912 = vmax.f32 %v854, 0.0
      %v913 = vmax.f32 %v855, 0.0
      %v914 = vmax.f32 %v856, 0.0
      %v915 = vmax.f32 %v857, 0.0
      %v916 = vmax.f32 %v858, 0.0
      %v917 = vmax.f32 %v859, 0.0
      %v918 = vmax.f32 %v860, 0.0
      %v919 = vmax.f32 %v861, 0.0
      %v920 = vmax.f32 %v862, 0.0
      %v921 = vmax.f32 %v863, 0.0
      %v922 = vmax.f32 %v864, 0.0
      %v923 = vmax.f32 %v865, 0.0
      %v924 = vmax.f32 %v866, 0.0
      %v925 = vmax.f32 %v867, 0.0
      %v926 = vmax.f32 %v868, 0.0
      %v927 = vmax.f32 %v869, 0.0
      %v928 = vmax.f32 %v870, 0.0
      %v929 = vmax.f32 %v871, 0.0
      %v930 = vmax.f32 %v872, 0.0
      %v931 = vmax.f32 %v873, 0.0
      %v932 = vmax.f32 %v874, 0.0
      %v933 = vmax.f32 %v875, 0.0
      %v934 = vmax.f32 %v876, 0.0
      %v935 = vmax.f32 %v877, 0.0
      %v936 = vmax.f32 %v878, 0.0
      %v937 = vmax.f32 %v879, 0.0
      %v938 = vmax.f32 %v880, 0.0
      %v939 = vmax.f32 %v881, 0.0
      %v940 = vmax.f32 %v882, 0.0
      %v941 = vmax.f32 %v883, 0.0
      %v942 = vmax.f32 %v884, 0.0
      %v943 = vmax.f32 %v885, 0.0
      %v944 = vmax.f32 %v886, 0.0
      %v945 = vmax.f32 %v887, 0.0
      %v946 = vmax.f32 %v888, 0.0
      %v947 = vmax.f32 %v889, 0.0
      %v948 = vmax.f32 %v890, 0.0
      %v949 = vmax.f32 %v891, 0.0
      %v950 = vmax.f32 %v892, 0.0
      %v951 = vmax.f32 %v893, 0.0
      %v952 = vmax.f32 %v894, 0.0
      %v953 = vmax.f32 %v895, 0.0
      %v954 = vmax.f32 %v896, 0.0
      %v955 = vmax.f32 %v897, 0.0
      %v956 = vmax.f32 %v898, 0.0
      %v957 = vmax.f32 %v899, 0.0
      %v958 = vmax.f32 %v900, 0.0
      %v959 = vmax.f32 %v901, 0.0
      %v960 = vmax.f32 %v902, 0.0
      %v961 = vmax.f32 %v903, 0.0
      %v962 = vmax.f32 %v904, 0.0
      %v963 = vmax.f32 %v905, 0.0
      %v964 = vmax.f32 %v906, 0.0
      %v965 = vmax.f32 %v907, 0.0
      %v966 = vmax.f32 %v908, 0.0
      %v967 = vmax.f32 %v909, 0.0
      %v968 = vpack.c.bf16 %v911, %v910
      %v969 = vpack.c.bf16 %v913, %v912
      %v970 = vpack.c.bf16 %v915, %v914
      %v971 = vpack.c.bf16 %v917, %v916
      %v972 = vpack.c.bf16 %v919, %v918
      %v973 = vpack.c.bf16 %v921, %v920
      %v974 = vpack.c.bf16 %v923, %v922
      %v975 = vpack.c.bf16 %v925, %v924
      %v976 = vpack.c.bf16 %v927, %v926
      %v977 = vpack.c.bf16 %v929, %v928
      %v978 = vpack.c.bf16 %v931, %v930
      %v979 = vpack.c.bf16 %v933, %v932
      %v980 = vpack.c.bf16 %v935, %v934
      %v981 = vpack.c.bf16 %v937, %v936
      %v982 = vpack.c.bf16 %v939, %v938
      %v983 = vpack.c.bf16 %v941, %v940
      %v984 = vpack.c.bf16 %v943, %v942
      %v985 = vpack.c.bf16 %v945, %v944
      %v986 = vpack.c.bf16 %v947, %v946
      %v987 = vpack.c.bf16 %v949, %v948
      %v988 = vpack.c.bf16 %v951, %v950
      %v989 = vpack.c.bf16 %v953, %v952
      %v990 = vpack.c.bf16 %v955, %v954
      %v991 = vpack.c.bf16 %v957, %v956
      %v992 = vpack.c.bf16 %v959, %v958
      %v993 = vpack.c.bf16 %v961, %v960
      %v994 = vpack.c.bf16 %v963, %v962
      %v995 = vpack.c.bf16 %v965, %v964
      %v996 = vpack.c.bf16 %v967, %v966
      %v1026 = vunpack.c.l.b16 %v968
      %v1027 = vunpack.c.h.b16 %v968
      %v1028 = vunpack.c.l.b16 %v969
      %v1029 = vunpack.c.h.b16 %v969
      %v1030 = vunpack.c.l.b16 %v970
      %v1031 = vunpack.c.h.b16 %v970
      %v1032 = vunpack.c.l.b16 %v971
      %v1033 = vunpack.c.h.b16 %v971
      %v1034 = vunpack.c.l.b16 %v972
      %v1035 = vunpack.c.h.b16 %v972
      %v1036 = vunpack.c.l.b16 %v973
      %v1037 = vunpack.c.h.b16 %v973
      %v1038 = vunpack.c.l.b16 %v974
      %v1039 = vunpack.c.h.b16 %v974
      %v1040 = vunpack.c.l.b16 %v975
      %v1041 = vunpack.c.h.b16 %v975
      %v1042 = vunpack.c.l.b16 %v976
      %v1043 = vunpack.c.h.b16 %v976
      %v1044 = vunpack.c.l.b16 %v977
      %v1045 = vunpack.c.h.b16 %v977
      %v1046 = vunpack.c.l.b16 %v978
      %v1047 = vunpack.c.h.b16 %v978
      %v1048 = vunpack.c.l.b16 %v979
      %v1049 = vunpack.c.h.b16 %v979
      %v1050 = vunpack.c.l.b16 %v980
      %v1051 = vunpack.c.h.b16 %v980
      %v1052 = vunpack.c.l.b16 %v981
      %v1053 = vunpack.c.h.b16 %v981
      %v1054 = vunpack.c.l.b16 %v982
      %v1055 = vunpack.c.h.b16 %v982
      %v1056 = vunpack.c.l.b16 %v983
      %v1057 = vunpack.c.h.b16 %v983
      %v1058 = vunpack.c.l.b16 %v984
      %v1059 = vunpack.c.h.b16 %v984
      %v1060 = vunpack.c.l.b16 %v985
      %v1061 = vunpack.c.h.b16 %v985
      %v1062 = vunpack.c.l.b16 %v986
      %v1063 = vunpack.c.h.b16 %v986
      %v1064 = vunpack.c.l.b16 %v987
      %v1065 = vunpack.c.h.b16 %v987
      %v1066 = vunpack.c.l.b16 %v988
      %v1067 = vunpack.c.h.b16 %v988
      %v1068 = vunpack.c.l.b16 %v989
      %v1069 = vunpack.c.h.b16 %v989
      %v1070 = vunpack.c.l.b16 %v990
      %v1071 = vunpack.c.h.b16 %v990
      %v1072 = vunpack.c.l.b16 %v991
      %v1073 = vunpack.c.h.b16 %v991
      %v1074 = vunpack.c.l.b16 %v992
      %v1075 = vunpack.c.h.b16 %v992
      %v1076 = vunpack.c.l.b16 %v993
      %v1077 = vunpack.c.h.b16 %v993
      %v1078 = vunpack.c.l.b16 %v994
      %v1079 = vunpack.c.h.b16 %v994
      %v1080 = vunpack.c.l.b16 %v995
      %v1081 = vunpack.c.h.b16 %v995
      %v1082 = vunpack.c.l.b16 %v996
      %v1083 = vunpack.c.h.b16 %v996
      %v1084 = vpack.c.b16 %v1026, %v1026
      %v1085 = vpack.c.b16 %v1027, %v1027
      %v1086 = vpack.c.b16 %v1028, %v1028
      %v1087 = vpack.c.b16 %v1029, %v1029
      %v1088 = vpack.c.b16 %v1030, %v1030
      %v1089 = vpack.c.b16 %v1031, %v1031
      %v1090 = vpack.c.b16 %v1032, %v1032
      %v1091 = vpack.c.b16 %v1033, %v1033
      %v1092 = vpack.c.b16 %v1034, %v1034
      %v1093 = vpack.c.b16 %v1035, %v1035
      %v1094 = vpack.c.b16 %v1036, %v1036
      %v1095 = vpack.c.b16 %v1037, %v1037
      %v1096 = vpack.c.b16 %v1038, %v1038
      %v1097 = vpack.c.b16 %v1039, %v1039
      %v1098 = vpack.c.b16 %v1040, %v1040
      %v1099 = vpack.c.b16 %v1041, %v1041
      %v1100 = vpack.c.b16 %v1042, %v1042
      %v1101 = vpack.c.b16 %v1043, %v1043
      %v1102 = vpack.c.b16 %v1044, %v1044
      %v1103 = vpack.c.b16 %v1045, %v1045
      %v1104 = vpack.c.b16 %v1046, %v1046
      %v1105 = vpack.c.b16 %v1047, %v1047
      %v1106 = vpack.c.b16 %v1048, %v1048
      %v1107 = vpack.c.b16 %v1049, %v1049
      %v1108 = vpack.c.b16 %v1050, %v1050
      %v1109 = vpack.c.b16 %v1051, %v1051
      %v1110 = vpack.c.b16 %v1052, %v1052
      %v1111 = vpack.c.b16 %v1053, %v1053
      %v1112 = vpack.c.b16 %v1054, %v1054
      %v1113 = vpack.c.b16 %v1055, %v1055
      %v1114 = vpack.c.b16 %v1056, %v1056
      %v1115 = vpack.c.b16 %v1057, %v1057
      %v1116 = vpack.c.b16 %v1058, %v1058
      %v1117 = vpack.c.b16 %v1059, %v1059
      %v1118 = vpack.c.b16 %v1060, %v1060
      %v1119 = vpack.c.b16 %v1061, %v1061
      %v1120 = vpack.c.b16 %v1062, %v1062
      %v1121 = vpack.c.b16 %v1063, %v1063
      %v1122 = vpack.c.b16 %v1064, %v1064
      %v1123 = vpack.c.b16 %v1065, %v1065
      %v1124 = vpack.c.b16 %v1066, %v1066
      %v1125 = vpack.c.b16 %v1067, %v1067
      %v1126 = vpack.c.b16 %v1068, %v1068
      %v1127 = vpack.c.b16 %v1069, %v1069
      %v1128 = vpack.c.b16 %v1070, %v1070
      %v1129 = vpack.c.b16 %v1071, %v1071
      %v1130 = vpack.c.b16 %v1072, %v1072
      %v1131 = vpack.c.b16 %v1073, %v1073
      %v1132 = vpack.c.b16 %v1074, %v1074
      %v1133 = vpack.c.b16 %v1075, %v1075
      %v1134 = vpack.c.b16 %v1076, %v1076
      %v1135 = vpack.c.b16 %v1077, %v1077
      %v1136 = vpack.c.b16 %v1078, %v1078
      %v1137 = vpack.c.b16 %v1079, %v1079
      %v1138 = vpack.c.b16 %v1080, %v1080
      %v1139 = vpack.c.b16 %v1081, %v1081
      %v1140 = vpack.c.b16 %v1082, %v1082
      %v1141 = vpack.c.b16 %v1083, %v1083
      %1200 = vst [vmem:[%s199] sm:$0xf] %v1084
      %1201 = vst [vmem:[%s199 + $0x4] sm:$0xf] %v1085
      %1202 = vst [vmem:[%s199 + $0x8] sm:$0xf] %v1086
      %1203 = vst [vmem:[%s199 + $0xc] sm:$0xf] %v1087
      %1204 = vst [vmem:[%s199 + $0x10] sm:$0xf] %v1088
      %1205 = vst [vmem:[%s199 + $0x14] sm:$0xf] %v1089
      %1206 = vst [vmem:[%s199 + $0x18] sm:$0xf] %v1090
      %1207 = vst [vmem:[%s199 + $0x1c] sm:$0xf] %v1091
      %1208 = vst [vmem:[%s199 + $0x20] sm:$0xf] %v1092
      %1209 = vst [vmem:[%s199 + $0x24] sm:$0xf] %v1093
      %1210 = vst [vmem:[%s199 + $0x28] sm:$0xf] %v1094
      %1211 = vst [vmem:[%s199 + $0x2c] sm:$0xf] %v1095
      %1212 = vst [vmem:[%s199 + $0x30] sm:$0xf] %v1096
      %1213 = vst [vmem:[%s199 + $0x34] sm:$0xf] %v1097
      %1214 = vst [vmem:[%s199 + $0x38] sm:$0xf] %v1098
      %1215 = vst [vmem:[%s199 + $0x3c] sm:$0xf] %v1099
      %1216 = vst [vmem:[%s199 + $0x40] sm:$0xf] %v1100
      %1217 = vst [vmem:[%s199 + $0x44] sm:$0xf] %v1101
      %1218 = vst [vmem:[%s199 + $0x48] sm:$0xf] %v1102
      %1219 = vst [vmem:[%s199 + $0x4c] sm:$0xf] %v1103
      %1220 = vst [vmem:[%s199 + $0x50] sm:$0xf] %v1104
      %1221 = vst [vmem:[%s199 + $0x54] sm:$0xf] %v1105
      %1222 = vst [vmem:[%s199 + $0x58] sm:$0xf] %v1106
      %1223 = vst [vmem:[%s199 + $0x5c] sm:$0xf] %v1107
      %1224 = vst [vmem:[%s199 + $0x60] sm:$0xf] %v1108
      %1225 = vst [vmem:[%s199 + $0x64] sm:$0xf] %v1109
      %1226 = vst [vmem:[%s199 + $0x68] sm:$0xf] %v1110
      %1227 = vst [vmem:[%s199 + $0x6c] sm:$0xf] %v1111
      %1228 = vst [vmem:[%s199 + $0x70] sm:$0xf] %v1112
      %1229 = vst [vmem:[%s199 + $0x74] sm:$0xf] %v1113
      %1230 = vst [vmem:[%s199 + $0x78] sm:$0xf] %v1114
      %1231 = vst [vmem:[%s199 + $0x7c] sm:$0xf] %v1115
      %1232 = vst [vmem:[%s199 + $0x80] sm:$0xf] %v1116
      %1233 = vst [vmem:[%s199 + $0x84] sm:$0xf] %v1117
      %1234 = vst [vmem:[%s199 + $0x88] sm:$0xf] %v1118
      %1235 = vst [vmem:[%s199 + $0x8c] sm:$0xf] %v1119
      %1236 = vst [vmem:[%s199 + $0x90] sm:$0xf] %v1120
      %1237 = vst [vmem:[%s199 + $0x94] sm:$0xf] %v1121
      %1238 = vst [vmem:[%s199 + $0x98] sm:$0xf] %v1122
      %1239 = vst [vmem:[%s199 + $0x9c] sm:$0xf] %v1123
      %1240 = vst [vmem:[%s199 + $0xa0] sm:$0xf] %v1124
      %1241 = vst [vmem:[%s199 + $0xa4] sm:$0xf] %v1125
      %1242 = vst [vmem:[%s199 + $0xa8] sm:$0xf] %v1126
      %1243 = vst [vmem:[%s199 + $0xac] sm:$0xf] %v1127
      %1244 = vst [vmem:[%s199 + $0xb0] sm:$0xf] %v1128
      %1245 = vst [vmem:[%s199 + $0xb4] sm:$0xf] %v1129
      %1246 = vst [vmem:[%s199 + $0xb8] sm:$0xf] %v1130
      %1247 = vst [vmem:[%s199 + $0xbc] sm:$0xf] %v1131
      %1248 = vst [vmem:[%s199 + $0xc0] sm:$0xf] %v1132
      %1249 = vst [vmem:[%s199 + $0xc4] sm:$0xf] %v1133
      %1250 = vst [vmem:[%s199 + $0xc8] sm:$0xf] %v1134
      %1251 = vst [vmem:[%s199 + $0xcc] sm:$0xf] %v1135
      %1252 = vst [vmem:[%s199 + $0xd0] sm:$0xf] %v1136
      %1253 = vst [vmem:[%s199 + $0xd4] sm:$0xf] %v1137
      %1254 = vst [vmem:[%s199 + $0xd8] sm:$0xf] %v1138
      %1255 = vst [vmem:[%s199 + $0xdc] sm:$0xf] %v1139
      %1256 = vst [vmem:[%s199 + $0xe0] sm:$0xf] %v1140
      %1257 = vst [vmem:[%s199 + $0xe4] sm:$0xf] %v1141
      %s1258 = smul.u32 58, %s15
      %p1259 = scmp.lt.s32.totalorder %s1258, 347
      %s1260 = scalar_select %p1259, %s1258, 347
      %s1261 = smul.addr %s1260, 4
      %s1262 = scalar_lea.vmem %s4, %s1261
      // Predicated region
      $region37: #{fused_matmul.1} parent=35 // pred_check
        %p1263 = pneg %p122
      $region38: #{fused_matmul.1} parent=35 // pred_check_branch
        %1265 = sbr.rel (%p1263) target = $region40
      $region39: #{fused_matmul.1} parent=35 // pred_region
        %s1266 = smul.u32 58, %s15
      $region40: #{fused_matmul.1} parent=35 // pred_fallthru
        _
    $region36: #{fused_matmul.1} parent=5 // pred_fallthru
      _
    %p1267 = scmp.le.s32.totalorder 2, %s10
    // Predicated region
    $region41: #{fused_matmul.1} parent=5 // pred_check
      %p1268 = pneg %p1267
    $region42: #{fused_matmul.1} parent=5 // pred_check_branch
      %1270 = sbr.rel (%p1268) target = $region44
    $region43: #{fused_matmul.1} parent=5 // pred_region
      %s1271 = ssub.s32 %s10, 2
      // Predicated region
      $region45: #{fused_matmul.1} parent=43 // pred_check
        %p1272 = pneg %p128
      $region46: #{fused_matmul.1} parent=43 // pred_check_branch
        %1274 = sbr.rel (%p1272) target = $region48
      $region47: #{fused_matmul.1} parent=43 // pred_region
        %s1275 = smul.u32 58, %s16
        %p1276 = scmp.lt.s32.totalorder %s1275, 347
        %s1277 = scalar_select %p1276, %s1275, 347
        %s1278 = smul.addr %s1277, 4
        %s1279 = scalar_lea.vmem %s4, %s1278
      $region48: #{fused_matmul.1} parent=43 // pred_fallthru
        _
    $region44: #{fused_matmul.1} parent=5 // pred_fallthru
      _
  $region6: #{fused_matmul.1} parent=0 // loop_footer
    %s14 = sadd.s32 1, %s10
  $region7: #{fused_matmul.1} parent=0 // loop_footer_branch
    %9 = sbr.rel target = $region3
  $region8: #{fused_matmul.1} parent=0 // loop_exit
    _

</llo_original>
